<compile_context>
chip_gen: v5e
topology: v5e:2x2
jax: 0.10.0
libtpu: 0.0.40
codegen_flags: <defaults>
</compile_context>

<pallas_src>
import functools

import jax
import jax.numpy as jnp
from jax.experimental import pallas as pl
from jax.experimental.pallas import tpu as pltpu

LANE = 128
MAX_TILE = 512  # per-buffer A tile <= 512*512*2B = 512 KiB (fits v7x 64 MiB VMEM easily)
VMEM_LIMIT_BYTES = 32 * 1024 * 1024


def _round_up(x, m):
    return ((x + m - 1) // m) * m


def _compiler_params(semantics):
    return pltpu.CompilerParams(
        dimension_semantics=semantics,
        vmem_limit_bytes=VMEM_LIMIT_BYTES,
    )


# ---------------------------------------------------------------------------
# Kernels
# ---------------------------------------------------------------------------

def linear_kernel(x_ref, w_ref, b_ref, o_ref):
    """o = x @ W + b  (bf16 operands, f32 accumulation, bf16 output)."""
    acc = jnp.dot(x_ref[...], w_ref[...], preferred_element_type=jnp.float32)
    acc = acc + b_ref[...]
    o_ref[...] = acc.astype(o_ref.dtype)


def agg_relu_lin_kernel(a_ref, h_ref, w_ref, b_ref, o_ref, acc_ref):
    """Tiled  acc += A[i,k] @ h[k];  epilogue: ReLU, then next layer's linear."""
    k = pl.program_id(1)

    @pl.when(k == 0)
    def _():
        acc_ref[...] = jnp.zeros_like(acc_ref)

    acc_ref[...] += jnp.dot(a_ref[...], h_ref[...],
                            preferred_element_type=jnp.float32)

    @pl.when(k == pl.num_programs(1) - 1)
    def _():
        act = jnp.maximum(acc_ref[...], 0.0)            # f32 ReLU (v5e-safe)
        # F.dropout(p=0.5) -> identity in eval mode.
        lin = jnp.dot(act.astype(jnp.bfloat16), w_ref[...],
                      preferred_element_type=jnp.float32)
        lin = lin + b_ref[...]                          # bias once per row tile
        o_ref[...] = lin.astype(o_ref.dtype)


def agg_logsoftmax_kernel(a_ref, h_ref, o_ref, acc_ref, *, num_valid):
    """Tiled  acc += A[i,k] @ h[k];  epilogue: masked, stable log_softmax."""
    k = pl.program_id(1)

    @pl.when(k == 0)
    def _():
        acc_ref[...] = jnp.zeros_like(acc_ref)

    acc_ref[...] += jnp.dot(a_ref[...], h_ref[...],
                            preferred_element_type=jnp.float32)

    @pl.when(k == pl.num_programs(1) - 1)
    def _():
        logits = acc_ref[...]
        # Padded lanes must not contribute to max/sum.
        lane = jax.lax.broadcasted_iota(jnp.int32, logits.shape, 1)
        masked = jnp.where(lane < num_valid, logits, -1e30)
        m = jnp.max(masked, axis=-1, keepdims=True)
        s = masked - m
        denom = jnp.sum(jnp.exp(s), axis=-1, keepdims=True)
        o_ref[...] = (s - jnp.log(denom)).astype(o_ref.dtype)


# ---------------------------------------------------------------------------
# pallas_call wrappers
# ---------------------------------------------------------------------------

def linear_pallas(x_b, w_b, b_f32, *, tm):
    n_pad, f_in = x_b.shape
    f_out = w_b.shape[1]
    return pl.pallas_call(
        linear_kernel,
        grid=(n_pad // tm,),
        out_shape=jax.ShapeDtypeStruct((n_pad, f_out), jnp.bfloat16),
        in_specs=[
            pl.BlockSpec((tm, f_in), lambda i: (i, 0)),
            pl.BlockSpec((f_in, f_out), lambda i: (0, 0)),
            pl.BlockSpec((1, f_out), lambda i: (0, 0)),
        ],
        out_specs=pl.BlockSpec((tm, f_out), lambda i: (i, 0)),
        compiler_params=_compiler_params(("parallel",)),
    )(x_b, w_b, b_f32)


def agg_relu_lin_pallas(adj_b, h_b, w_b, b_f32, *, tm, tk):
    n_pad = adj_b.shape[0]
    f_in = h_b.shape[1]
    f_out = w_b.shape[1]
    return pl.pallas_call(
        agg_relu_lin_kernel,
        grid=(n_pad // tm, n_pad // tk),
        out_shape=jax.ShapeDtypeStruct((n_pad, f_out), jnp.bfloat16),
        in_specs=[
            pl.BlockSpec((tm, tk), lambda i, k: (i, k)),        # A_norm tile
            pl.BlockSpec((tk, f_in), lambda i, k: (k, 0)),      # h rows
            pl.BlockSpec((f_in, f_out), lambda i, k: (0, 0)),   # next-layer W
            pl.BlockSpec((1, f_out), lambda i, k: (0, 0)),      # next-layer b
        ],
        out_specs=pl.BlockSpec((tm, f_out), lambda i, k: (i, 0)),
        scratch_shapes=[pltpu.VMEM((tm, f_in), jnp.float32)],
        compiler_params=_compiler_params(("parallel", "arbitrary")),
    )(adj_b, h_b, w_b, b_f32)


def agg_logsoftmax_pallas(adj_b, h_b, *, num_valid, tm, tk):
    n_pad = adj_b.shape[0]
    f_in = h_b.shape[1]
    kern = functools.partial(agg_logsoftmax_kernel, num_valid=num_valid)
    return pl.pallas_call(
        kern,
        grid=(n_pad // tm, n_pad // tk),
        out_shape=jax.ShapeDtypeStruct((n_pad, f_in), jnp.float32),
        in_specs=[
            pl.BlockSpec((tm, tk), lambda i, k: (i, k)),        # A_norm tile
            pl.BlockSpec((tk, f_in), lambda i, k: (k, 0)),      # h rows
        ],
        out_specs=pl.BlockSpec((tm, f_in), lambda i, k: (i, 0)),
        scratch_shapes=[pltpu.VMEM((tm, f_in), jnp.float32)],
        compiler_params=_compiler_params(("parallel", "arbitrary")),
    )(adj_b, h_b)


# ---------------------------------------------------------------------------
# Graph glue + forward
# ---------------------------------------------------------------------------

def build_norm_adj(edge_index, num_nodes):
    """Plain-JAX glue: self-loops + D^{-1/2} A D^{-1/2} densified.

    Reproduces: add_self_loops; deg = degree(col); norm = d^-1/2[row]*d^-1/2[col];
    propagate(aggr='add') with message norm*x_j => out[col] += norm * x[row],
    i.e. A_norm[col, row] += norm.
    # TODO(synk): for large N replace this dense O(N^2) adjacency with a
    # padded-CSR + scalar-prefetch gather design.
    """
    loops = jnp.arange(num_nodes, dtype=edge_index.dtype)
    ei = jnp.concatenate([edge_index, jnp.stack([loops, loops])], axis=1)
    row, col = ei[0], ei[1]
    deg = jnp.zeros((num_nodes,), jnp.float32).at[col].add(1.0)
    deg_inv_sqrt = jnp.where(deg > 0, deg ** -0.5, 0.0)  # inf -> 0
    norm = deg_inv_sqrt[row] * deg_inv_sqrt[col]
    adj = jnp.zeros((num_nodes, num_nodes), jnp.float32).at[col, row].add(norm)
    return adj


def _pad2(a, rows, cols):
    return jnp.pad(a, ((0, rows - a.shape[0]), (0, cols - a.shape[1])))


def mmd_gcn_net_forward(x, edge_index, params):
    """MMD_GCNNet.forward (eval mode): stacked MMD_GCNConv + ReLU, final log_softmax."""
    n, f_in = x.shape
    num_classes = params[-1][0].shape[1]

    adj = build_norm_adj(edge_index, n)

    # Tiling: cap at 512 (safe for v7x 64 MiB VMEM), pad N to a tile multiple.
    n_pad_base = _round_up(max(n, 1), LANE)
    tile = min(MAX_TILE, n_pad_base)
    n_pad = _round_up(n, tile)

    adj_b = _pad2(adj, n_pad, n_pad).astype(jnp.bfloat16)

    f_in_pad = _round_up(f_in, LANE)
    x_b = _pad2(x, n_pad, f_in_pad).astype(jnp.bfloat16)

    # Zero-pad weights/biases to 128-lane widths (exact math; padded lanes stay 0).
    padded = []
    for w_t, b in params:
        fi, fo = w_t.shape
        fi_p, fo_p = _round_up(fi, LANE), _round_up(fo, LANE)
        w_p = _pad2(w_t, fi_p, fo_p).astype(jnp.bfloat16)
        b_p = jnp.pad(b, (0, fo_p - fo)).reshape(1, fo_p).astype(jnp.float32)
        padded.append((w_p, b_p))

    # Layer 0's linear runs standalone; every later linear is fused into the
    # previous aggregation kernel's epilogue (after ReLU, dropout==identity).
    h = linear_pallas(x_b, padded[0][0], padded[0][1], tm=tile)

    n_layers = len(params)
    out = None
    for layer in range(n_layers):
        last = layer == n_layers - 1
        if last:
            out = agg_logsoftmax_pallas(
                adj_b, h, num_valid=params[layer][0].shape[1], tm=tile, tk=tile)
        else:
            w_next, b_next = padded[layer + 1]
            h = agg_relu_lin_pallas(adj_b, h, w_next, b_next, tm=tile, tk=tile)

    return out[:n, :num_classes]


# ---------------------------------------------------------------------------
# Demo / correctness check
# ---------------------------------------------------------------------------

if __name__ == "__main__":
    key = jax.random.PRNGKey(0)
    N, F_IN, HIDDEN, NUM_CLASSES = 8, 16, 16, 4

    k_x, k_w1, k_b1, k_w2, k_b2 = jax.random.split(key, 5)
    x = jax.random.normal(k_x, (N, F_IN), dtype=jnp.float32)

    # Small deterministic directed edge list (ring + shortcuts), shape [2, E].
    src = jnp.array([0, 1, 2, 3, 4, 5, 6, 7, 0, 2, 4, 6], dtype=jnp.int32)
    dst = jnp.array([1, 2, 3, 4, 5, 6, 7, 0, 4, 6, 0, 2], dtype=jnp.int32)
    edge_index = jnp.stack([src, dst], axis=0)

    def lin_init(kw, kb, fan_in, fan_out):
        # torch.nn.Linear default init: U(-1/sqrt(fan_in), 1/sqrt(fan_in))
        bound = 1.0 / float(fan_in) ** 0.5
        w = jax.random.uniform(kw, (fan_out, fan_in), jnp.float32, -bound, bound)
        b = jax.random.uniform(kb, (fan_out,), jnp.float32, -bound, bound)
        return w.T, b  # store W transposed as [fan_in, fan_out] for x @ W^T

    params = [
        lin_init(k_w1, k_b1, F_IN, HIDDEN),         # conv0: num_features -> 16
        lin_init(k_w2, k_b2, HIDDEN, NUM_CLASSES),  # conv1: 16 -> num_classes
    ]

    out = mmd_gcn_net_forward(x, edge_index, params)
    out = jax.block_until_ready(out)

    # Pure-JAX reference mirroring the kernel's bf16 operand rounding
    # (f32 accumulation everywhere, bf16-stored intermediates).
    def q(a):
        return a.astype(jnp.bfloat16).astype(jnp.float32)

    adj_ref = q(build_norm_adj(edge_index, N))
    h_ref = q(q(x) @ q(params[0][0]) + params[0][1])
    ref = None
    for layer in range(len(params)):
        last = layer == len(params) - 1
        agg = adj_ref @ h_ref
        if last:
            ref = jax.nn.log_softmax(agg, axis=1)
        else:
            act = jnp.maximum(agg, 0.0)
            w_next, b_next = params[layer + 1]
            h_ref = q(q(act) @ q(w_next) + b_next)

    assert out.shape == (N, NUM_CLASSES)
    assert jnp.allclose(out, ref, atol=2e-3, rtol=2e-3), "mismatch vs reference"

    print("KERNEL_OK")
</pallas_src>

<mosaic_0001>
module attributes {stable_mosaic.version = 11 : i64} {
  func.func @linear_kernel(%arg0: i32, %arg1: memref<128x128xbf16, #tpu.memory_space<vmem>>, %arg2: memref<128x128xbf16, #tpu.memory_space<vmem>>, %arg3: memref<1x128xf32, #tpu.memory_space<vmem>>, %arg4: memref<128x128xbf16, #tpu.memory_space<vmem>>) attributes {dimension_semantics = [#tpu.dimension_semantics<parallel>], iteration_bounds = array<i64: 1>, scalar_prefetch = 0 : i64, scratch_operands = 0 : i64, tpu.core_type = #tpu.core_type<tc>, window_params = [{transform_indices = @transform_0, window_bounds = array<i64: 128, 128>}, {pipeline_mode = #tpu.pipeline_mode<synchronous>, transform_indices = @transform_1, window_bounds = array<i64: 128, 128>}, {pipeline_mode = #tpu.pipeline_mode<synchronous>, transform_indices = @transform_2, window_bounds = array<i64: 1, 128>}, {transform_indices = @transform_3, window_bounds = array<i64: 128, 128>}]} {
    %c0 = arith.constant 0 : index
    %c0_0 = arith.constant 0 : index
    %0 = vector.load %arg1[%c0, %c0_0] : memref<128x128xbf16, #tpu.memory_space<vmem>>, vector<128x128xbf16>
    %c0_1 = arith.constant 0 : index
    %c0_2 = arith.constant 0 : index
    %1 = vector.load %arg2[%c0_1, %c0_2] : memref<128x128xbf16, #tpu.memory_space<vmem>>, vector<128x128xbf16>
    %cst = arith.constant dense<0.000000e+00> : vector<128x128xf32>
    %2 = tpu.matmul %0, %1, %cst {dimension_numbers = #tpu.dot_dimension_numbers<[1], [0], [0], [1], [0, 0, 1, 1], [], []>} : vector<128x128xbf16>, vector<128x128xbf16>, vector<128x128xf32> -> vector<128x128xf32>
    %c0_3 = arith.constant 0 : index
    %c0_4 = arith.constant 0 : index
    %3 = vector.load %arg3[%c0_3, %c0_4] : memref<1x128xf32, #tpu.memory_space<vmem>>, vector<1x128xf32>
    %4 = vector.broadcast %3 : vector<1x128xf32> to vector<128x128xf32>
    %5 = arith.addf %2, %4 : vector<128x128xf32>
    %6 = arith.truncf %5 : vector<128x128xf32> to vector<128x128xbf16>
    %c0_5 = arith.constant 0 : index
    %c0_6 = arith.constant 0 : index
    %7 = vector.load %arg4[%c0_5, %c0_6] : memref<128x128xbf16, #tpu.memory_space<vmem>>, vector<128x128xbf16>
    tpu.vector_store %arg4[%c0_5, %c0_6], %6 {strides = array<i32>} : memref<128x128xbf16, #tpu.memory_space<vmem>>, vector<128x128xbf16>,
    return
  }
  func.func @transform_0(%arg0: i32) -> (i32, i32) {
    %c0_i32 = arith.constant 0 : i32
    %c0_i32_0 = arith.constant 0 : i32
    return %arg0, %c0_i32 : i32, i32
  }
  func.func @transform_1(%arg0: i32) -> (i32, i32) {
    %c0_i32 = arith.constant 0 : i32
    %c0_i32_0 = arith.constant 0 : i32
    %c0_i32_1 = arith.constant 0 : i32
    return %c0_i32, %c0_i32_0 : i32, i32
  }
  func.func @transform_2(%arg0: i32) -> (i32, i32) {
    %c0_i32 = arith.constant 0 : i32
    %c0_i32_0 = arith.constant 0 : i32
    %c0_i32_1 = arith.constant 0 : i32
    return %c0_i32, %c0_i32_0 : i32, i32
  }
  func.func @transform_3(%arg0: i32) -> (i32, i32) {
    %c0_i32 = arith.constant 0 : i32
    %c0_i32_0 = arith.constant 0 : i32
    return %arg0, %c0_i32 : i32, i32
  }
}

</mosaic_0001>

<llo_original>
// kernel: tpu_custom_call.1
$region0: #{tpu_custom_call.1}
  #allocation0 [shape = 'u32[]', space=smem, size = 0x4, offset = 0x4, fixed_abs, tag = 'smem constant byte address 0x4 - core index']
  #allocation1 [shape = 'u32[72,128]{1,0:T(1,128)}', space=vmem, size = 0x9000, scoped, tag = 'internal scratch']
  %s0 = inlined_call_operand.hbm [shape: bf16[128,128], index: 0, kind: input, shape index: {}]
  %s1 = inlined_call_operand.hbm [shape: bf16[128,128], index: 1, kind: input, shape index: {}]
  %s2 = inlined_call_operand.vmem [shape: f32[1,128], index: 2, kind: input, shape index: {}]
  %s3 = inlined_call_operand.hbm [shape: bf16[128,128], index: 3, kind: output, shape index: {}]
  %s4 = sld [smem:[#allocation0]]
  $region30: #{tpu_custom_call.1} parent=0
    _
  %s6 = ssub.s32 1, %s4
  %s7 = scalar_select 0, %s6, %s4
  $region1: #{tpu_custom_call.1} parent=0
    #allocation2 [shape = 'u8[32768]{0}', space=vmem, size = 0x8000, scoped, tag = 'input window, operand 0, single buffered']
    #allocation3 [shape = 's32[1]{0}', space=sflag, size = 0x4, scoped, tag = 'scoped memory for tpu_custom_call.1']
    #allocation4 [shape = 's32[1]{0}', space=sflag, size = 0x4, scoped, tag = 'scoped memory for tpu_custom_call.1']
    #allocation5 [shape = 'u8[32768]{0}', space=vmem, size = 0x8000, scoped, tag = 'input window, operand 1, single buffered']
    #allocation6 [shape = 's32[1]{0}', space=sflag, size = 0x4, scoped, tag = 'scoped memory for tpu_custom_call.1']
    #allocation7 [shape = 'u8[32768]{0}', space=vmem, size = 0x8000, scoped, tag = 'output window, operand 0, single buffered']
    %8 = vsyncpa [#allocation3], 0
    %9 = vsyncpa [#allocation6], 0
    %10 = vsyncpa [#allocation4], 0
    // Predicated region
    $region2: #{tpu_custom_call.1} parent=1 // pred_check
      _
    $region3: #{tpu_custom_call.1} parent=1 // pred_check_branch
      %12 = sbr.rel (0) target = $region5
    $region4: #{tpu_custom_call.1} parent=1 // pred_region
      %14 = vsyncadd [#allocation3], 0
      %s15 = sshll.u32 %s0, 4
      %s16 = int_to_ptr.hbm [resolvable:$true] %s15
      %s17 = sshll.u32 [#allocation2], 4
      %s18 = int_to_ptr.vmem [resolvable:$true] %s17
      %23 = dma.hbm_to_vmem [thread:$0]  %s16, 1024, %s18, [#allocation3], 64, 64, 4
    $region5: #{tpu_custom_call.1} parent=1 // pred_fallthru
      _
    // Predicated region
    $region6: #{tpu_custom_call.1} parent=1 // pred_check
      _
    $region7: #{tpu_custom_call.1} parent=1 // pred_check_branch
      %25 = sbr.rel (0) target = $region9
    $region8: #{tpu_custom_call.1} parent=1 // pred_region
      %27 = vsyncadd [#allocation6], 0
      %s28 = sshll.u32 %s1, 4
      %s29 = int_to_ptr.hbm [resolvable:$true] %s28
      %s30 = sshll.u32 [#allocation5], 4
      %s31 = int_to_ptr.vmem [resolvable:$true] %s30
      %36 = dma.hbm_to_vmem [thread:$0]  %s29, 1024, %s31, [#allocation6], 64, 64, 4
    $region9: #{tpu_custom_call.1} parent=1 // pred_fallthru
      _
    // Predicated region
    $region10: #{tpu_custom_call.1} parent=1 // pred_check
      _
    $region11: #{tpu_custom_call.1} parent=1 // pred_check_branch
      %38 = sbr.rel (0) target = $region13
    $region12: #{tpu_custom_call.1} parent=1 // pred_region
      _
    $region13: #{tpu_custom_call.1} parent=1 // pred_fallthru
      _
    // Predicated region
    $region14: #{tpu_custom_call.1} parent=1 // pred_check
      _
    $region15: #{tpu_custom_call.1} parent=1 // pred_check_branch
      %40 = sbr.rel (0) target = $region17
    $region16: #{tpu_custom_call.1} parent=1 // pred_region
      %42 = dma.done [#allocation3], 1024
    $region17: #{tpu_custom_call.1} parent=1 // pred_fallthru
      _
    // Predicated region
    $region18: #{tpu_custom_call.1} parent=1 // pred_check
      _
    $region19: #{tpu_custom_call.1} parent=1 // pred_check_branch
      %44 = sbr.rel (0) target = $region21
    $region20: #{tpu_custom_call.1} parent=1 // pred_region
      %46 = dma.done [#allocation6], 1024
    $region21: #{tpu_custom_call.1} parent=1 // pred_fallthru
      _
    %v47 = vld [vmem:[#allocation2] sm:$0xf]
    %v48 = vld [vmem:[#allocation2 + $0x4] sm:$0xf]
    %v49 = vld [vmem:[#allocation2 + $0x8] sm:$0xf]
    %v50 = vld [vmem:[#allocation2 + $0xc] sm:$0xf]
    %v51 = vld [vmem:[#allocation2 + $0x10] sm:$0xf]
    %v52 = vld [vmem:[#allocation2 + $0x14] sm:$0xf]
    %v53 = vld [vmem:[#allocation2 + $0x18] sm:$0xf]
    %v54 = vld [vmem:[#allocation2 + $0x1c] sm:$0xf]
    %v55 = vld [vmem:[#allocation2 + $0x20] sm:$0xf]
    %v56 = vld [vmem:[#allocation2 + $0x24] sm:$0xf]
    %v57 = vld [vmem:[#allocation2 + $0x28] sm:$0xf]
    %v58 = vld [vmem:[#allocation2 + $0x2c] sm:$0xf]
    %v59 = vld [vmem:[#allocation2 + $0x30] sm:$0xf]
    %v60 = vld [vmem:[#allocation2 + $0x34] sm:$0xf]
    %v61 = vld [vmem:[#allocation2 + $0x38] sm:$0xf]
    %v62 = vld [vmem:[#allocation2 + $0x3c] sm:$0xf]
    %v63 = vld [vmem:[#allocation5] sm:$0xf]
    %v64 = vld [vmem:[#allocation5 + $0x4] sm:$0xf]
    %v65 = vld [vmem:[#allocation5 + $0x8] sm:$0xf]
    %v66 = vld [vmem:[#allocation5 + $0xc] sm:$0xf]
    %v67 = vld [vmem:[#allocation5 + $0x10] sm:$0xf]
    %v68 = vld [vmem:[#allocation5 + $0x14] sm:$0xf]
    %v69 = vld [vmem:[#allocation5 + $0x18] sm:$0xf]
    %v70 = vld [vmem:[#allocation5 + $0x1c] sm:$0xf]
    %v71 = vld [vmem:[#allocation5 + $0x20] sm:$0xf]
    %v72 = vld [vmem:[#allocation5 + $0x24] sm:$0xf]
    %v73 = vld [vmem:[#allocation5 + $0x28] sm:$0xf]
    %v74 = vld [vmem:[#allocation5 + $0x2c] sm:$0xf]
    %v75 = vld [vmem:[#allocation5 + $0x30] sm:$0xf]
    %v76 = vld [vmem:[#allocation5 + $0x34] sm:$0xf]
    %v77 = vld [vmem:[#allocation5 + $0x38] sm:$0xf]
    %v78 = vld [vmem:[#allocation5 + $0x3c] sm:$0xf]
    %v79 = vld [vmem:[%s2] sm:$0x1]
    %v81 = vperm.slane %v79, 0
    %v99 = vunpack.c.l.b16 %v47
    %v100 = vunpack.c.l.b16 %v48
    %v101 = vunpack.c.l.b16 %v49
    %v102 = vunpack.c.l.b16 %v50
    %v103 = vunpack.c.l.b16 %v51
    %v104 = vunpack.c.l.b16 %v52
    %v105 = vunpack.c.l.b16 %v53
    %v106 = vunpack.c.l.b16 %v54
    %v107 = vunpack.c.l.b16 %v55
    %v108 = vunpack.c.l.b16 %v56
    %v109 = vunpack.c.l.b16 %v57
    %v110 = vunpack.c.l.b16 %v58
    %v111 = vunpack.c.l.b16 %v59
    %v112 = vunpack.c.l.b16 %v60
    %v113 = vunpack.c.l.b16 %v61
    %v114 = vunpack.c.l.b16 %v62
    %v115 = vpack.c.b16 %v100, %v99
    %v116 = vpack.c.b16 %v102, %v101
    %v117 = vpack.c.b16 %v104, %v103
    %v118 = vpack.c.b16 %v106, %v105
    %v119 = vpack.c.b16 %v108, %v107
    %v120 = vpack.c.b16 %v110, %v109
    %v121 = vpack.c.b16 %v112, %v111
    %v122 = vpack.c.b16 %v114, %v113
    %v147 = vunpack.c.l.b16 %v63
    %v148 = vunpack.c.l.b16 %v64
    %v149 = vunpack.c.l.b16 %v65
    %v150 = vunpack.c.l.b16 %v66
    %v151 = vunpack.c.l.b16 %v67
    %v152 = vunpack.c.l.b16 %v68
    %v153 = vunpack.c.l.b16 %v69
    %v154 = vunpack.c.l.b16 %v70
    %v155 = vunpack.c.l.b16 %v71
    %v156 = vunpack.c.l.b16 %v72
    %v157 = vunpack.c.l.b16 %v73
    %v158 = vunpack.c.l.b16 %v74
    %v159 = vunpack.c.l.b16 %v75
    %v160 = vunpack.c.l.b16 %v76
    %v161 = vunpack.c.l.b16 %v77
    %v162 = vunpack.c.l.b16 %v78
    %v163 = vpack.c.b16 %v148, %v147
    %v164 = vpack.c.b16 %v150, %v149
    %v165 = vpack.c.b16 %v152, %v151
    %v166 = vpack.c.b16 %v154, %v153
    %v167 = vpack.c.b16 %v156, %v155
    %v168 = vpack.c.b16 %v158, %v157
    %v169 = vpack.c.b16 %v160, %v159
    %v170 = vpack.c.b16 %v162, %v161
    %179 = vmatpush.bf16.msra.mxu0 %v170
    %180 = vmatpush.bf16.msra.mxu0 %v169
    %181 = vmatpush.bf16.msra.mxu0 %v168
    %182 = vmatpush.bf16.msra.mxu0 %v167
    %183 = vmatpush.bf16.msra.mxu0 %v166
    %184 = vmatpush.bf16.msra.mxu0 %v165
    %185 = vmatpush.bf16.msra.mxu0 %v164
    %186 = vmatpush.bf16.msra.mxu0 %v163
    %187 = vmatmul.bf16.gmra.mxu0 %v115
    %v188 = vpop.f32.mrf.mxu0
    %v189 = vadd.f32 %v81, %v188
    %v190 = vpop.f32.mrf.mxu0
    %v191 = vadd.f32 %v81, %v190
    %192 = vmatmul.bf16.gmra.mxu0 %v116
    %v193 = vpop.f32.mrf.mxu0
    %v194 = vadd.f32 %v81, %v193
    %v195 = vpop.f32.mrf.mxu0
    %v196 = vadd.f32 %v81, %v195
    %197 = vmatmul.bf16.gmra.mxu0 %v117
    %v198 = vpop.f32.mrf.mxu0
    %v199 = vadd.f32 %v81, %v198
    %v200 = vpop.f32.mrf.mxu0
    %v201 = vadd.f32 %v81, %v200
    %202 = vmatmul.bf16.gmra.mxu0 %v118
    %v203 = vpop.f32.mrf.mxu0
    %v204 = vadd.f32 %v81, %v203
    %v205 = vpop.f32.mrf.mxu0
    %v206 = vadd.f32 %v81, %v205
    %207 = vmatmul.bf16.gmra.mxu0 %v119
    %v208 = vpop.f32.mrf.mxu0
    %v209 = vadd.f32 %v81, %v208
    %v210 = vpop.f32.mrf.mxu0
    %v211 = vadd.f32 %v81, %v210
    %212 = vmatmul.bf16.gmra.mxu0 %v120
    %v213 = vpop.f32.mrf.mxu0
    %v214 = vadd.f32 %v81, %v213
    %v215 = vpop.f32.mrf.mxu0
    %v216 = vadd.f32 %v81, %v215
    %217 = vmatmul.bf16.gmra.mxu0 %v121
    %v218 = vpop.f32.mrf.mxu0
    %v219 = vadd.f32 %v81, %v218
    %v220 = vpop.f32.mrf.mxu0
    %v221 = vadd.f32 %v81, %v220
    %222 = vmatmul.bf16.gmra.mxu0 %v122
    %v223 = vpop.f32.mrf.mxu0
    %v224 = vadd.f32 %v81, %v223
    %v225 = vpop.f32.mrf.mxu0
    %v226 = vadd.f32 %v81, %v225
    %227 = vdwg.mxu0
    %v228 = vpack.c.bf16 %v189, %v189
    %v229 = vpack.c.bf16 %v191, %v191
    %v230 = vpack.c.bf16 %v194, %v194
    %v231 = vpack.c.bf16 %v196, %v196
    %v232 = vpack.c.bf16 %v199, %v199
    %v233 = vpack.c.bf16 %v201, %v201
    %v234 = vpack.c.bf16 %v204, %v204
    %v235 = vpack.c.bf16 %v206, %v206
    %v236 = vpack.c.bf16 %v209, %v209
    %v237 = vpack.c.bf16 %v211, %v211
    %v238 = vpack.c.bf16 %v214, %v214
    %v239 = vpack.c.bf16 %v216, %v216
    %v240 = vpack.c.bf16 %v219, %v219
    %v241 = vpack.c.bf16 %v221, %v221
    %v242 = vpack.c.bf16 %v224, %v224
    %v243 = vpack.c.bf16 %v226, %v226
    %244 = vst [vmem:[#allocation7] sm:$0xf] %v228
    %245 = vst [vmem:[#allocation7 + $0x4] sm:$0xf] %v229
    %246 = vst [vmem:[#allocation7 + $0x8] sm:$0xf] %v230
    %247 = vst [vmem:[#allocation7 + $0xc] sm:$0xf] %v231
    %248 = vst [vmem:[#allocation7 + $0x10] sm:$0xf] %v232
    %249 = vst [vmem:[#allocation7 + $0x14] sm:$0xf] %v233
    %250 = vst [vmem:[#allocation7 + $0x18] sm:$0xf] %v234
    %251 = vst [vmem:[#allocation7 + $0x1c] sm:$0xf] %v235
    %252 = vst [vmem:[#allocation7 + $0x20] sm:$0xf] %v236
    %253 = vst [vmem:[#allocation7 + $0x24] sm:$0xf] %v237
    %254 = vst [vmem:[#allocation7 + $0x28] sm:$0xf] %v238
    %255 = vst [vmem:[#allocation7 + $0x2c] sm:$0xf] %v239
    %256 = vst [vmem:[#allocation7 + $0x30] sm:$0xf] %v240
    %257 = vst [vmem:[#allocation7 + $0x34] sm:$0xf] %v241
    %258 = vst [vmem:[#allocation7 + $0x38] sm:$0xf] %v242
    %259 = vst [vmem:[#allocation7 + $0x3c] sm:$0xf] %v243
    // Predicated region
    $region22: #{tpu_custom_call.1} parent=1 // pred_check
      _
    $region23: #{tpu_custom_call.1} parent=1 // pred_check_branch
      %261 = sbr.rel (0) target = $region25
    $region24: #{tpu_custom_call.1} parent=1 // pred_region
      %263 = vsyncadd [#allocation4], 0
      %s264 = sshll.u32 [#allocation7], 4
      %s265 = int_to_ptr.vmem [resolvable:$true] %s264
      %s266 = sshll.u32 %s3, 4
      %s267 = int_to_ptr.hbm [resolvable:$true] %s266
      %272 = dma.vmem_to_hbm [thread:$0]  %s265, 1024, %s267, [#allocation4], 64, 64, 4
    $region25: #{tpu_custom_call.1} parent=1 // pred_fallthru
      _
    // Predicated region
    $region26: #{tpu_custom_call.1} parent=1 // pred_check
      _
    $region27: #{tpu_custom_call.1} parent=1 // pred_check_branch
      %274 = sbr.rel (0) target = $region29
    $region28: #{tpu_custom_call.1} parent=1 // pred_region
      %276 = dma.done [#allocation4], 1024
    $region29: #{tpu_custom_call.1} parent=1 // pred_fallthru
      _
    %277 = vsyncpa [#allocation3], 1
    %278 = vsyncpa [#allocation6], 1
    %279 = vsyncpa [#allocation4], 1

</llo_original>
